<compile_context>
chip_gen: v7x
topology: tpu7x:2x2x1
jax: 0.10.0
libtpu: 0.0.40
codegen_flags: <defaults>
</compile_context>

<pallas_src>
import functools

import jax
import jax.numpy as jnp
import numpy as np
from jax.experimental import pallas as pl
from jax.experimental.pallas import tpu as pltpu


def _round_up(v, m):
    return (v + m - 1) // m * m


def _gsda_kernel(x_ref, d_ref, wc_ref, g_ref, be_ref, o_ref, *, bn_count, eps):
    """One grid step = one block of output channels; fully self-contained.

    x_ref  : (Ci, BNp)  input slab, channels on sublanes, batch*nodes on lanes
    d_ref  : (1,  BNp)  sgda degree scale per position (host-computed)
    wc_ref : (TCO, Ci)  1x1-conv weight block
    g_ref  : (TCO, 1)   BN gamma        be_ref : (TCO, 1) BN beta
    o_ref  : (TCO, BNp) output block (lane-dense, unmasked stores)
    """
    # ---- 1x1 conv over the merged batch: ONE MXU matmul, lane-dense columns.
    y = jnp.dot(wc_ref[...], x_ref[...], preferred_element_type=jnp.float32)

    # ---- sgda degree scale, applied post-matmul (a per-lane scale commutes
    #      exactly with the per-sublane channel mix).  Padded lanes of x are
    #      zero and no bias is added, so y (and z) are exactly 0 there.
    z = y * d_ref[...]

    # ---- training-mode BatchNorm2d (biased stats over the real B*N positions)
    #      fused with ReLU.  Full-width sums equal real sums because padded
    #      lanes hold exact zeros; the variance masks padded lanes after mean
    #      subtraction (numerically robust, no E[y^2]-mu^2 cancellation).
    cnt = jnp.float32(bn_count)
    mu = jnp.sum(z, axis=-1, keepdims=True) / cnt            # (TCO, 1)
    zc = z - mu
    if bn_count < z.shape[-1]:                                # static: only if padded
        lane = jax.lax.broadcasted_iota(jnp.int32, z.shape, dimension=1)
        zc = jnp.where(lane < bn_count, zc, 0.0)
    var = jnp.sum(zc * zc, axis=-1, keepdims=True) / cnt      # biased variance
    scale = jax.lax.rsqrt(var + jnp.float32(eps)) * g_ref[...]
    o_ref[...] = jnp.maximum(zc * scale + be_ref[...], 0.0)


def gsda_block(x, w, params):
    """x: (B, C, N, 1) float32, w: (B, N) float32 -> (B, C, N, 1) float32."""
    B, C, N, last = x.shape
    assert last == 1, "GSDA_Block expects input of shape (B, C, N, 1)"
    BN = B * N
    eps = 1e-5

    Ci = _round_up(max(C, 8), 8)                    # padded input channels (sublanes)
    TCO = min(_round_up(max(C, 8), 8), 128)         # output-channel block size
    Co = _round_up(max(C, 8), TCO)                  # padded output channels
    BNp = _round_up(max(BN, 128), 128)              # lane-dense batch*nodes (128-mult)

    # ---- host-side layout plumbing: channels -> sublanes, batch*nodes -> lanes.
    x2d = jnp.transpose(x[..., 0], (1, 0, 2)).reshape(C, BN).astype(jnp.float32)
    x2d = jnp.pad(x2d, ((0, Ci - C), (0, BNp - BN)))

    # ---- sgda degree D, hoisted to the host (review opt #2).  D == 2.0
    #      identically (softmax row-sum + identity row-sum); kept dynamic for
    #      faithfulness, folded into the kernel epilogue as one lane scale.
    v = jnp.maximum(jnp.tanh(w.astype(jnp.float32)), 0.0)     # (B, N)
    a = v[:, :, None] * v[:, None, :]                         # (B, N, N)
    d = jnp.sum(jax.nn.softmax(a, axis=-1), axis=-1) + 1.0    # (B, N) == 2.0
    d_row = jnp.pad(d.reshape(1, BN), ((0, 0), (0, BNp - BN)))

    wc = jnp.pad(params["conv_w"].astype(jnp.float32).reshape(C, C),
                 ((0, Co - C), (0, Ci - C)))
    gamma = jnp.pad(params["bn_gamma"].astype(jnp.float32).reshape(-1, 1),
                    ((0, Co - C), (0, 0)), constant_values=1.0)
    beta = jnp.pad(params["bn_beta"].astype(jnp.float32).reshape(-1, 1),
                   ((0, Co - C), (0, 0)))
    # conv bias intentionally not passed: exactly cancelled by the training-mode
    # BatchNorm mean subtraction (the pure-JAX reference still adds it).

    # ---- VMEM budget derived from actual block sizes (double-buffered blocks
    #      + a few (TCO, BNp) fp32 temporaries), clamped for v7x headroom.
    blk_bytes = 4 * (Ci * BNp + BNp + TCO * Ci + 2 * TCO + TCO * BNp)
    tmp_bytes = 4 * 4 * TCO * BNp
    vmem_limit = min(max(2 * blk_bytes + tmp_bytes + (4 << 20), 16 << 20), 100 << 20)

    kernel = functools.partial(_gsda_kernel, bn_count=BN, eps=eps)
    out2d = pl.pallas_call(
        kernel,
        out_shape=jax.ShapeDtypeStruct((Co, BNp), jnp.float32),
        grid_spec=pltpu.PrefetchScalarGridSpec(
            num_scalar_prefetch=0,
            grid=(Co // TCO,),
            in_specs=[
                pl.BlockSpec((Ci, BNp), lambda i: (0, 0)),    # x slab (constant index)
                pl.BlockSpec((1, BNp), lambda i: (0, 0)),     # sgda degree row
                pl.BlockSpec((TCO, Ci), lambda i: (i, 0)),    # conv 1x1 weight block
                pl.BlockSpec((TCO, 1), lambda i: (i, 0)),     # BN gamma
                pl.BlockSpec((TCO, 1), lambda i: (i, 0)),     # BN beta
            ],
            out_specs=pl.BlockSpec((TCO, BNp), lambda i: (i, 0)),
        ),
        compiler_params=pltpu.CompilerParams(
            dimension_semantics=("parallel",),   # self-contained output-channel blocks
            vmem_limit_bytes=vmem_limit,
        ),
    )(x2d, d_row, wc, gamma, beta)

    return out2d[:C, :BN].reshape(C, B, N).transpose(1, 0, 2)[..., None]


def init_params(key, c):
    k1, k2 = jax.random.split(key)
    return dict(
        conv_w=0.3 * jax.random.normal(k1, (c, c), jnp.float32),   # Conv2d(c, c, 1x1) weight
        conv_b=0.1 * jax.random.normal(k2, (c,), jnp.float32),     # cancelled by training BN
        bn_gamma=jnp.ones((c,), jnp.float32),                      # PyTorch BatchNorm2d defaults
        bn_beta=jnp.zeros((c,), jnp.float32),
    )


def reference(x, w, p):
    """Pure-JAX mirror of the PyTorch training-mode forward (NCHW, H=N, W=1)."""
    eps = 1e-5
    v = jnp.maximum(jnp.tanh(w), 0.0)                        # (B, N)
    A = v[:, :, None] * v[:, None, :]                        # (B, N, N)
    A_S = jax.nn.softmax(A, axis=-1)
    D = jnp.sum(A_S + jnp.eye(w.shape[-1])[None], axis=-1)   # (B, N)
    out = x[..., 0] * D[:, None, :]                          # sgda: scale each node
    y = jnp.einsum("oi,bin->bon", p["conv_w"], out,
                   precision=jax.lax.Precision.HIGHEST) + p["conv_b"][None, :, None]
    mu = y.mean(axis=(0, 2), keepdims=True)
    var = ((y - mu) ** 2).mean(axis=(0, 2), keepdims=True)   # biased, training-mode BN
    y = (y - mu) / jnp.sqrt(var + eps) * p["bn_gamma"][None, :, None] + p["bn_beta"][None, :, None]
    return jnp.maximum(y, 0.0)[..., None]                    # (B, C, N, 1)


if __name__ == "__main__":
    key = jax.random.PRNGKey(0)
    kx, kw, kp = jax.random.split(key, 3)

    B, C, N = 2, 4, 16                         # batch=2, in_channel=4, 16 graph nodes
    x = jax.random.normal(kx, (B, C, N, 1), jnp.float32)
    w = jax.random.normal(kw, (B, N), jnp.float32)
    params = init_params(kp, C)

    out = jax.block_until_ready(gsda_block(x, w, params))
    ref = reference(x, w, params)
    np.testing.assert_allclose(np.asarray(out), np.asarray(ref), rtol=1e-4, atol=1e-4)

    print("KERNEL_OK")
</pallas_src>

<mosaic_0001>
module attributes {stable_mosaic.version = 11 : i64} {
  func.func @_gsda_kernel(%arg0: i32, %arg1: memref<8x128xf32, #tpu.memory_space<vmem>>, %arg2: memref<1x128xf32, #tpu.memory_space<vmem>>, %arg3: memref<8x8xf32, #tpu.memory_space<vmem>>, %arg4: memref<8x1xf32, #tpu.memory_space<vmem>>, %arg5: memref<8x1xf32, #tpu.memory_space<vmem>>, %arg6: memref<8x128xf32, #tpu.memory_space<vmem>>) attributes {dimension_semantics = [#tpu.dimension_semantics<parallel>], iteration_bounds = array<i64: 1>, scalar_prefetch = 0 : i64, scratch_operands = 0 : i64, tpu.core_type = #tpu.core_type<tc>, window_params = [{pipeline_mode = #tpu.pipeline_mode<synchronous>, transform_indices = @transform_0, window_bounds = array<i64: 8, 128>}, {pipeline_mode = #tpu.pipeline_mode<synchronous>, transform_indices = @transform_1, window_bounds = array<i64: 1, 128>}, {transform_indices = @transform_2, window_bounds = array<i64: 8, 8>}, {transform_indices = @transform_3, window_bounds = array<i64: 8, 1>}, {transform_indices = @transform_4, window_bounds = array<i64: 8, 1>}, {transform_indices = @transform_5, window_bounds = array<i64: 8, 128>}]} {
    %c0 = arith.constant 0 : index
    %c0_0 = arith.constant 0 : index
    %0 = vector.load %arg3[%c0, %c0_0] : memref<8x8xf32, #tpu.memory_space<vmem>>, vector<8x8xf32>
    %c0_1 = arith.constant 0 : index
    %c0_2 = arith.constant 0 : index
    %1 = vector.load %arg1[%c0_1, %c0_2] : memref<8x128xf32, #tpu.memory_space<vmem>>, vector<8x128xf32>
    %cst = arith.constant dense<0.000000e+00> : vector<8x128xf32>
    %2 = tpu.matmul %0, %1, %cst {dimension_numbers = #tpu.dot_dimension_numbers<[1], [0], [0], [1], [0, 0, 1, 1], [], []>} : vector<8x8xf32>, vector<8x128xf32>, vector<8x128xf32> -> vector<8x128xf32>
    %c0_3 = arith.constant 0 : index
    %c0_4 = arith.constant 0 : index
    %3 = vector.load %arg2[%c0_3, %c0_4] : memref<1x128xf32, #tpu.memory_space<vmem>>, vector<1x128xf32>
    %4 = vector.broadcast %3 : vector<1x128xf32> to vector<8x128xf32>
    %5 = arith.mulf %2, %4 : vector<8x128xf32>
    %cst_5 = arith.constant dense<0.000000e+00> : vector<8xf32>
    %6 = vector.multi_reduction <add>, %5, %cst_5 [1] : vector<8x128xf32> to vector<8xf32>
    %7 = vector.shape_cast %6 : vector<8xf32> to vector<8x1xf32>
    %cst_6 = arith.constant 3.200000e+01 : f32
    %8 = vector.broadcast %cst_6 : f32 to vector<8x1xf32>
    %9 = arith.divf %7, %8 : vector<8x1xf32>
    %10 = vector.broadcast %9 : vector<8x1xf32> to vector<8x128xf32>
    %11 = arith.subf %5, %10 : vector<8x128xf32>
    %12 = tpu.iota {dimensions = array<i32: 1>} : vector<8x128xi32>
    %c32_i32 = arith.constant 32 : i32
    %13 = vector.broadcast %c32_i32 : i32 to vector<8x128xi32>
    %14 = arith.cmpi slt, %12, %13 : vector<8x128xi32>
    %cst_7 = arith.constant 0.000000e+00 : f32
    %15 = vector.broadcast %cst_7 : f32 to vector<8x128xf32>
    %16 = arith.select %14, %11, %15 : vector<8x128xi1>, vector<8x128xf32>
    %17 = arith.mulf %16, %16 : vector<8x128xf32>
    %cst_8 = arith.constant dense<0.000000e+00> : vector<8xf32>
    %18 = vector.multi_reduction <add>, %17, %cst_8 [1] : vector<8x128xf32> to vector<8xf32>
    %19 = vector.shape_cast %18 : vector<8xf32> to vector<8x1xf32>
    %cst_9 = arith.constant 3.200000e+01 : f32
    %20 = vector.broadcast %cst_9 : f32 to vector<8x1xf32>
    %21 = arith.divf %19, %20 : vector<8x1xf32>
    %cst_10 = arith.constant 9.99999974E-6 : f32
    %22 = vector.broadcast %cst_10 : f32 to vector<8x1xf32>
    %23 = arith.addf %21, %22 : vector<8x1xf32>
    %24 = math.rsqrt %23 : vector<8x1xf32>
    %c0_11 = arith.constant 0 : index
    %c0_12 = arith.constant 0 : index
    %25 = vector.load %arg4[%c0_11, %c0_12] : memref<8x1xf32, #tpu.memory_space<vmem>>, vector<8x1xf32>
    %26 = arith.mulf %24, %25 : vector<8x1xf32>
    %27 = vector.broadcast %26 : vector<8x1xf32> to vector<8x128xf32>
    %28 = arith.mulf %16, %27 : vector<8x128xf32>
    %c0_13 = arith.constant 0 : index
    %c0_14 = arith.constant 0 : index
    %29 = vector.load %arg5[%c0_13, %c0_14] : memref<8x1xf32, #tpu.memory_space<vmem>>, vector<8x1xf32>
    %30 = vector.broadcast %29 : vector<8x1xf32> to vector<8x128xf32>
    %31 = arith.addf %28, %30 : vector<8x128xf32>
    %cst_15 = arith.constant 0.000000e+00 : f32
    %32 = vector.broadcast %cst_15 : f32 to vector<8x128xf32>
    %33 = arith.maximumf %31, %32 : vector<8x128xf32>
    %c0_16 = arith.constant 0 : index
    %c0_17 = arith.constant 0 : index
    %34 = vector.load %arg6[%c0_16, %c0_17] : memref<8x128xf32, #tpu.memory_space<vmem>>, vector<8x128xf32>
    tpu.vector_store %arg6[%c0_16, %c0_17], %33 {strides = array<i32>} : memref<8x128xf32, #tpu.memory_space<vmem>>, vector<8x128xf32>,
    return
  }
  func.func @transform_0(%arg0: i32) -> (i32, i32) {
    %c0_i32 = arith.constant 0 : i32
    %c0_i32_0 = arith.constant 0 : i32
    %c0_i32_1 = arith.constant 0 : i32
    return %c0_i32, %c0_i32_0 : i32, i32
  }
  func.func @transform_1(%arg0: i32) -> (i32, i32) {
    %c0_i32 = arith.constant 0 : i32
    %c0_i32_0 = arith.constant 0 : i32
    %c0_i32_1 = arith.constant 0 : i32
    return %c0_i32, %c0_i32_0 : i32, i32
  }
  func.func @transform_2(%arg0: i32) -> (i32, i32) {
    %c0_i32 = arith.constant 0 : i32
    %c0_i32_0 = arith.constant 0 : i32
    return %arg0, %c0_i32 : i32, i32
  }
  func.func @transform_3(%arg0: i32) -> (i32, i32) {
    %c0_i32 = arith.constant 0 : i32
    %c0_i32_0 = arith.constant 0 : i32
    return %arg0, %c0_i32 : i32, i32
  }
  func.func @transform_4(%arg0: i32) -> (i32, i32) {
    %c0_i32 = arith.constant 0 : i32
    %c0_i32_0 = arith.constant 0 : i32
    return %arg0, %c0_i32 : i32, i32
  }
  func.func @transform_5(%arg0: i32) -> (i32, i32) {
    %c0_i32 = arith.constant 0 : i32
    %c0_i32_0 = arith.constant 0 : i32
    return %arg0, %c0_i32 : i32, i32
  }
}

</mosaic_0001>

<llo_original>
// kernel: tpu_custom_call.1
$region0: #{tpu_custom_call.1}
  #allocation0 [shape = 'u32[]', space=smem, size = 0x4, offset = 0x4, fixed_abs, tag = 'smem constant byte address 0x4 - core index']
  #allocation1 [shape = 'u32[144,128]{1,0:T(1,128)}', space=vmem, size = 0x12000, scoped, tag = 'internal scratch']
  %s0 = inlined_call_operand.vmem [shape: f32[8,128], index: 0, kind: input, shape index: {}]
  %s1 = inlined_call_operand.vmem [shape: f32[1,128], index: 1, kind: input, shape index: {}]
  %s2 = inlined_call_operand.vmem [shape: f32[8,8], index: 2, kind: input, shape index: {}]
  %s3 = inlined_call_operand.vmem [shape: f32[8,1], index: 3, kind: input, shape index: {}]
  %s4 = inlined_call_operand.vmem [shape: f32[8,1], index: 4, kind: input, shape index: {}]
  %s5 = inlined_call_operand.hbm [shape: f32[8,128], index: 5, kind: output, shape index: {}]
  %s6 = sld [smem:[#allocation0]]
  $region30: #{tpu_custom_call.1} parent=0
    _
  %s8 = ssub.s32 1, %s6
  %s9 = scalar_select 0, %s8, %s6
  $region1: #{tpu_custom_call.1} parent=0
    #allocation2 [shape = 'u8[4096]{0}', space=vmem, size = 0x1000, scoped, tag = 'output window, operand 0, single buffered']
    #allocation3 [shape = 's32[1]{0}', space=sflag, size = 0x4, scoped, tag = 'scoped memory for tpu_custom_call.1']
    %10 = vsyncpa [#allocation3], 0
    // Predicated region
    $region2: #{tpu_custom_call.1} parent=1 // pred_check
      _
    $region3: #{tpu_custom_call.1} parent=1 // pred_check_branch
      %12 = sbr.rel (0) target = $region5
    $region4: #{tpu_custom_call.1} parent=1 // pred_region
      _
    $region5: #{tpu_custom_call.1} parent=1 // pred_fallthru
      _
    // Predicated region
    $region6: #{tpu_custom_call.1} parent=1 // pred_check
      _
    $region7: #{tpu_custom_call.1} parent=1 // pred_check_branch
      %14 = sbr.rel (0) target = $region9
    $region8: #{tpu_custom_call.1} parent=1 // pred_region
      _
    $region9: #{tpu_custom_call.1} parent=1 // pred_fallthru
      _
    // Predicated region
    $region10: #{tpu_custom_call.1} parent=1 // pred_check
      _
    $region11: #{tpu_custom_call.1} parent=1 // pred_check_branch
      %16 = sbr.rel (0) target = $region13
    $region12: #{tpu_custom_call.1} parent=1 // pred_region
      _
    $region13: #{tpu_custom_call.1} parent=1 // pred_fallthru
      _
    // Predicated region
    $region14: #{tpu_custom_call.1} parent=1 // pred_check
      _
    $region15: #{tpu_custom_call.1} parent=1 // pred_check_branch
      %18 = sbr.rel (0) target = $region17
    $region16: #{tpu_custom_call.1} parent=1 // pred_region
      _
    $region17: #{tpu_custom_call.1} parent=1 // pred_fallthru
      _
    // Predicated region
    $region18: #{tpu_custom_call.1} parent=1 // pred_check
      _
    $region19: #{tpu_custom_call.1} parent=1 // pred_check_branch
      %20 = sbr.rel (0) target = $region21
    $region20: #{tpu_custom_call.1} parent=1 // pred_region
      _
    $region21: #{tpu_custom_call.1} parent=1 // pred_fallthru
      _
    %v21 = vld [vmem:[%s2] sm:$0xff]
    %v22 = vld [vmem:[%s0] sm:$0xff]
    %vm23 = vcmask 64512
    %v25 = vsel %vm23, %v21, 0
    %27 = vmatprep.subr.mxu0 0.0
    %28 = vmatpush1.msra.mxu0 %v22
    %29 = vmatprep.subr.mxu0 0.0
    %30 = vmatpush1.msra.mxu0 0.0
    %31 = vmatprep.subr.mxu0 0.0
    %32 = vmatpush1.msra.mxu0 0.0
    %33 = vmatprep.subr.mxu0 0.0
    %34 = vmatpush1.msra.mxu0 0.0
    %35 = vmatprep.subr.mxu0 0.0
    %36 = vmatpush1.msra.mxu0 0.0
    %37 = vmatprep.subr.mxu0 0.0
    %38 = vmatpush1.msra.mxu0 0.0
    %39 = vmatprep.subr.mxu0 0.0
    %40 = vmatpush1.msra.mxu0 0.0
    %41 = vmatprep.subr.mxu0 0.0
    %42 = vmatpush1.msra.mxu0 0.0
    %43 = vmatprep.subr.mxu0 0.0
    %44 = vmatpush1.msra.mxu0 0.0
    %45 = vmatprep.subr.mxu0 0.0
    %46 = vmatpush1.msra.mxu0 0.0
    %47 = vmatprep.subr.mxu0 0.0
    %48 = vmatpush1.msra.mxu0 0.0
    %49 = vmatprep.subr.mxu0 0.0
    %50 = vmatpush1.msra.mxu0 0.0
    %51 = vmatprep.subr.mxu0 0.0
    %52 = vmatpush1.msra.mxu0 0.0
    %53 = vmatprep.subr.mxu0 0.0
    %54 = vmatpush1.msra.mxu0 0.0
    %55 = vmatprep.subr.mxu0 0.0
    %56 = vmatpush1.msra.mxu0 0.0
    %57 = vmatprep.subr.mxu0 0.0
    %58 = vmatpush1.msra.mxu0 0.0
    %59 = vmatprep.subr.mxu0 0.0
    %60 = vmatpush1.msra.mxu0 0.0
    %61 = vmatprep.subr.mxu0 0.0
    %62 = vmatpush1.msra.mxu0 0.0
    %63 = vmatprep.subr.mxu0 0.0
    %64 = vmatpush1.msra.mxu0 0.0
    %65 = vmatprep.subr.mxu0 0.0
    %66 = vmatpush1.msra.mxu0 0.0
    %67 = vmatprep.subr.mxu0 0.0
    %68 = vmatpush1.msra.mxu0 0.0
    %69 = vmatprep.subr.mxu0 0.0
    %70 = vmatpush1.msra.mxu0 0.0
    %71 = vmatprep.subr.mxu0 0.0
    %72 = vmatpush1.msra.mxu0 0.0
    %73 = vmatprep.subr.mxu0 0.0
    %74 = vmatpush1.msra.mxu0 0.0
    %75 = vmatprep.subr.mxu0 0.0
    %76 = vmatpush1.msra.mxu0 0.0
    %77 = vmatprep.subr.mxu0 0.0
    %78 = vmatpush1.msra.mxu0 0.0
    %79 = vmatprep.subr.mxu0 0.0
    %80 = vmatpush1.msra.mxu0 0.0
    %81 = vmatprep.subr.mxu0 0.0
    %82 = vmatpush1.msra.mxu0 0.0
    %83 = vmatprep.subr.mxu0 0.0
    %84 = vmatpush1.msra.mxu0 0.0
    %85 = vmatprep.subr.mxu0 0.0
    %86 = vmatpush1.msra.mxu0 0.0
    %87 = vmatprep.subr.mxu0 0.0
    %88 = vmatpush1.msra.mxu0 0.0
    %89 = vmatprep.subr.mxu0 0.0
    %90 = vmatpush1.msra.mxu0 0.0
    %91 = vmatprep.mubr.f32.mxu0 0.0
    %92 = vmatmul.mubr.f32.gmra.mrb[0].mxu0 %v25
    %v93 = vpop.f32.mrb[0].mxu0
    %v94 = vadd.f32 0.0, %v93
    %v95 = vpop.f32.mrb[0].mxu0
    %96 = vdwg.mxu0
    %v97 = vld [vmem:[%s1] sm:$0x1]
    %v99 = vlaneseq
    %v100 = vshrl.u32 %v99, 7
    %v101 = vsub.s32 0, %v100
    %v102 = vrot.slane %v97, %v101
    %v104 = vmul.f32 %v94, %v102
    %105 = vadd.xlane.f32.xlu0 %v104
    %v106 = vpop.xlane.xlu0 %105
    %v107 = vrcp.pop 32.0
    %v108 = vmul.f32 %v106, %v107
    %v109 = vsub.f32 %v104, %v108
    %v110 = vlaneseq
    %v111 = vand.u32 %v110, 127
    %vm112 = vcmp.lt.s32.totalorder %v111, 32
    %v113 = vsel %vm112, %v109, 0.0
    %v114 = vmul.f32 %v113, %v113
    %115 = vadd.xlane.f32.xlu0 %v114
    %v116 = vpop.xlane.xlu0 %115
    %v117 = vmul.f32 %v116, %v107
    %v118 = vadd.f32 %v117, 1e-05
    %v119 = vrsqrt.pop %v118
    %v120 = vld [vmem:[%s3] sm:$0xff]
    %v121 = vmul.f32 %v119, %v120
    %123 = vset.pattern.permute.xlu0 0
    %124 = vperm.xlu0 %123, %v121
    %v125 = vpop.permute.xlu0 %124
    %v127 = vmul.f32 %v113, %v125
    %v128 = vld [vmem:[%s4] sm:$0xff]
    %130 = vset.pattern.permute.xlu0 0
    %131 = vperm.xlu0 %130, %v128
    %v132 = vpop.permute.xlu0 %131
    %v134 = vadd.f32 %v127, %v132
    %v135 = vmax.f32 %v134, 0.0
    %136 = vst [vmem:[#allocation2] sm:$0xff] %v135
    // Predicated region
    $region22: #{tpu_custom_call.1} parent=1 // pred_check
      _
    $region23: #{tpu_custom_call.1} parent=1 // pred_check_branch
      %138 = sbr.rel (0) target = $region25
    $region24: #{tpu_custom_call.1} parent=1 // pred_region
      %s140 = ssub.s32 128, 128
      %141 = vsyncadd [#allocation3], %s140
      %s143 = sshll.u32 [#allocation2], 4
      %s144 = int_to_ptr.vmem [resolvable:$true] %s143
      %146 = dma.vmem_to_hbm [thread:$0]  %s144, 128, %s5, [#allocation3]
    $region25: #{tpu_custom_call.1} parent=1 // pred_fallthru
      _
    // Predicated region
    $region26: #{tpu_custom_call.1} parent=1 // pred_check
      _
    $region27: #{tpu_custom_call.1} parent=1 // pred_check_branch
      %148 = sbr.rel (0) target = $region29
    $region28: #{tpu_custom_call.1} parent=1 // pred_region
      %149 = dma.done [#allocation3], 128
    $region29: #{tpu_custom_call.1} parent=1 // pred_fallthru
      _
    %150 = vsyncpa [#allocation3], 1

</llo_original>
